<compile_context>
chip_gen: v6e
topology: v6e:2x2x1
jax: 0.10.0
libtpu: 0.0.40
codegen_flags: <defaults>
</compile_context>

<pallas_src>
import functools

import jax
import jax.numpy as jnp
from jax.experimental import pallas as pl
from jax.experimental.pallas import tpu as pltpu


def _model_kernel(gate_ref, x1_ref, x2_ref, x3_ref, out_ref, *, mm_dtype):
    # gate_ref : SMEM (1,) int32 scalar-prefetch       (1 if sum(x1) != 0 else 0)
    # x1_ref   : VMEM (n, n)  full x1 (resident; LHS tile sliced from it, also RHS)
    # x2_ref   : VMEM (tm, n) row tile of x2
    # x3_ref   : VMEM (n, n)  full x3 (resident RHS)
    # out_ref  : VMEM (tm, 2n) row tile of the output
    tm, n = x2_ref.shape

    i = pl.program_id(0)
    row0 = pl.multiple_of(i * tm, tm)
    x1_rows = x1_ref[pl.ds(row0, tm), :]        # (tm, n) LHS row tile of x1
    x1_full = x1_ref[...]                       # (n, n)  contraction RHS
    x2_rows = x2_ref[...]                       # (tm, n)
    x3 = x3_ref[...]                            # (n, n)

    # v[0] = torch.mm(x1, x1)   (row tile of it)
    a = jnp.dot(x1_rows.astype(mm_dtype), x1_full.astype(mm_dtype),
                preferred_element_type=jnp.float32)
    # v[1] = x2 + torch.mm(x2, x3)
    b = x2_rows + jnp.dot(x2_rows.astype(mm_dtype), x3.astype(mm_dtype),
                          preferred_element_type=jnp.float32)

    gate = gate_ref[0].astype(jnp.float32)      # scalar, hoisted to the wrapper

    # TODO(synk): the reference `cat(v,1) + cat(v2,1) + v[0].clamp(max=20)` adds
    # (N,2N) to (N,N) tensors and raises a broadcast RuntimeError in PyTorch; the
    # (N,N) addends are zero-extended over the right half here (chosen reading).
    out_ref[:, :n] = a + x1_rows * gate + jnp.minimum(a, 20.0)
    out_ref[:, n:] = b


def model_forward(x1, x2, x3):
    n = x1.shape[0]
    assert x1.shape == (n, n) and x2.shape == (n, n) and x3.shape == (n, n)

    # Row tile: 256 matches the v6e/v7x MXU and gives grid>1 (megacore) at n>=512.
    tm = n if n <= 256 else 256
    assert n % tm == 0
    grid = (n // tm,)

    # Scalar gate, computed once on the host/XLA side and prefetched into SMEM.
    gate = (jnp.sum(x1) != 0.0).astype(jnp.int32).reshape((1,))

    # bf16 MXU operands only once the problem is big enough to be compute-bound;
    # keeps small/medium sizes bit-comparable to the f32 reference.
    mm_dtype = jnp.bfloat16 if n >= 1024 else jnp.float32

    # Raise scoped VMEM only when the resident (n,n) RHS blocks need it.
    resident_bytes = 2 * n * n * 4                       # x1 + x3 kept resident
    stream_bytes = 2 * (tm * n * 4) + 2 * (tm * 2 * n * 4)  # x2 + out double buffers
    est = 2 * resident_bytes + stream_bytes + (4 << 20)
    compiler_kwargs = dict(dimension_semantics=("parallel",))
    if est > (16 << 20):
        compiler_kwargs["vmem_limit_bytes"] = min(est, 100 << 20)

    kernel = functools.partial(_model_kernel, mm_dtype=mm_dtype)

    return pl.pallas_call(
        kernel,
        out_shape=jax.ShapeDtypeStruct((n, 2 * n), jnp.float32),
        grid_spec=pltpu.PrefetchScalarGridSpec(
            num_scalar_prefetch=1,
            grid=grid,
            in_specs=[
                pl.BlockSpec((n, n), lambda i, g: (0, 0)),    # x1 full (resident)
                pl.BlockSpec((tm, n), lambda i, g: (i, 0)),   # x2 row tile
                pl.BlockSpec((n, n), lambda i, g: (0, 0)),    # x3 full (resident)
            ],
            out_specs=pl.BlockSpec((tm, 2 * n), lambda i, g: (i, 0)),
        ),
        compiler_params=pltpu.CompilerParams(**compiler_kwargs),
    )(gate, x1, x2, x3)


def _reference(x1, x2, x3):
    a = x1 @ x1
    b = x2 + x2 @ x3
    gate = (jnp.sum(x1) != 0.0).astype(jnp.float32)
    left = a + x1 * gate + jnp.minimum(a, 20.0)
    return jnp.concatenate([left, b], axis=1)


if __name__ == "__main__":
    N = 128
    key = jax.random.PRNGKey(0)
    k1, k2, k3 = jax.random.split(key, 3)
    x1 = jax.random.normal(k1, (N, N), dtype=jnp.float32)
    x2 = jax.random.normal(k2, (N, N), dtype=jnp.float32)
    x3 = jax.random.normal(k3, (N, N), dtype=jnp.float32)

    out = jax.block_until_ready(model_forward(x1, x2, x3))
    ref = _reference(x1, x2, x3)

    assert out.shape == (N, 2 * N)
    assert jnp.allclose(out, ref, atol=1e-3, rtol=1e-3)
    print("KERNEL_OK")
</pallas_src>

<mosaic_0001>
module attributes {stable_mosaic.version = 11 : i64} {
  func.func @_model_kernel(%arg0: i32, %arg1: memref<1xi32, #tpu.memory_space<smem>>, %arg2: memref<128x128xf32, #tpu.memory_space<vmem>>, %arg3: memref<128x128xf32, #tpu.memory_space<vmem>>, %arg4: memref<128x128xf32, #tpu.memory_space<vmem>>, %arg5: memref<128x256xf32, #tpu.memory_space<vmem>>) attributes {dimension_semantics = [#tpu.dimension_semantics<parallel>], iteration_bounds = array<i64: 1>, scalar_prefetch = 1 : i64, scratch_operands = 0 : i64, tpu.core_type = #tpu.core_type<tc>, window_params = [{pipeline_mode = #tpu.pipeline_mode<synchronous>, transform_indices = @transform_0, window_bounds = array<i64: 128, 128>}, {transform_indices = @transform_1, window_bounds = array<i64: 128, 128>}, {pipeline_mode = #tpu.pipeline_mode<synchronous>, transform_indices = @transform_2, window_bounds = array<i64: 128, 128>}, {transform_indices = @transform_3, window_bounds = array<i64: 128, 256>}]} {
    %c128_i32 = arith.constant 128 : i32
    %0 = arith.muli %arg0, %c128_i32 : i32
    %1 = tpu.assume_multiple %0, 128 : i32
    %2 = arith.index_cast %1 : i32 to index
    %c0 = arith.constant 0 : index
    %3 = vector.load %arg2[%2, %c0] : memref<128x128xf32, #tpu.memory_space<vmem>>, vector<128x128xf32>
    %c0_0 = arith.constant 0 : index
    %c0_1 = arith.constant 0 : index
    %4 = vector.load %arg2[%c0_0, %c0_1] : memref<128x128xf32, #tpu.memory_space<vmem>>, vector<128x128xf32>
    %c0_2 = arith.constant 0 : index
    %c0_3 = arith.constant 0 : index
    %5 = vector.load %arg3[%c0_2, %c0_3] : memref<128x128xf32, #tpu.memory_space<vmem>>, vector<128x128xf32>
    %c0_4 = arith.constant 0 : index
    %c0_5 = arith.constant 0 : index
    %6 = vector.load %arg4[%c0_4, %c0_5] : memref<128x128xf32, #tpu.memory_space<vmem>>, vector<128x128xf32>
    %cst = arith.constant dense<0.000000e+00> : vector<128x128xf32>
    %7 = tpu.matmul %3, %4, %cst {dimension_numbers = #tpu.dot_dimension_numbers<[1], [0], [0], [1], [0, 0, 1, 1], [], []>} : vector<128x128xf32>, vector<128x128xf32>, vector<128x128xf32> -> vector<128x128xf32>
    %cst_6 = arith.constant dense<0.000000e+00> : vector<128x128xf32>
    %8 = tpu.matmul %5, %6, %cst_6 {dimension_numbers = #tpu.dot_dimension_numbers<[1], [0], [0], [1], [0, 0, 1, 1], [], []>} : vector<128x128xf32>, vector<128x128xf32>, vector<128x128xf32> -> vector<128x128xf32>
    %9 = arith.addf %5, %8 : vector<128x128xf32>
    %c0_7 = arith.constant 0 : index
    %10 = memref.load %arg1[%c0_7] : memref<1xi32, #tpu.memory_space<smem>>
    %11 = arith.sitofp %10 : i32 to f32
    %12 = vector.broadcast %11 : f32 to vector<128x128xf32>
    %13 = arith.mulf %3, %12 : vector<128x128xf32>
    %14 = arith.addf %7, %13 : vector<128x128xf32>
    %cst_8 = arith.constant 2.000000e+01 : f32
    %15 = vector.broadcast %cst_8 : f32 to vector<128x128xf32>
    %16 = arith.minimumf %7, %15 : vector<128x128xf32>
    %17 = arith.addf %14, %16 : vector<128x128xf32>
    %c0_9 = arith.constant 0 : index
    %c0_10 = arith.constant 0 : index
    %18 = vector.load %arg5[%c0_9, %c0_10] : memref<128x256xf32, #tpu.memory_space<vmem>>, vector<128x128xf32>
    tpu.vector_store %arg5[%c0_9, %c0_10], %17 {strides = array<i32>} : memref<128x256xf32, #tpu.memory_space<vmem>>, vector<128x128xf32>,
    %c0_11 = arith.constant 0 : index
    %c128 = arith.constant 128 : index
    %19 = vector.load %arg5[%c0_11, %c128] : memref<128x256xf32, #tpu.memory_space<vmem>>, vector<128x128xf32>
    tpu.vector_store %arg5[%c0_11, %c128], %9 {strides = array<i32>} : memref<128x256xf32, #tpu.memory_space<vmem>>, vector<128x128xf32>,
    return
  }
  func.func @transform_0(%arg0: i32, %arg1: memref<1xi32, #tpu.memory_space<smem>>) -> (i32, i32) {
    %c0_i32 = arith.constant 0 : i32
    %c0_i32_0 = arith.constant 0 : i32
    %c0_i32_1 = arith.constant 0 : i32
    return %c0_i32, %c0_i32_0 : i32, i32
  }
  func.func @transform_1(%arg0: i32, %arg1: memref<1xi32, #tpu.memory_space<smem>>) -> (i32, i32) {
    %c0_i32 = arith.constant 0 : i32
    %c0_i32_0 = arith.constant 0 : i32
    return %arg0, %c0_i32 : i32, i32
  }
  func.func @transform_2(%arg0: i32, %arg1: memref<1xi32, #tpu.memory_space<smem>>) -> (i32, i32) {
    %c0_i32 = arith.constant 0 : i32
    %c0_i32_0 = arith.constant 0 : i32
    %c0_i32_1 = arith.constant 0 : i32
    return %c0_i32, %c0_i32_0 : i32, i32
  }
  func.func @transform_3(%arg0: i32, %arg1: memref<1xi32, #tpu.memory_space<smem>>) -> (i32, i32) {
    %c0_i32 = arith.constant 0 : i32
    %c0_i32_0 = arith.constant 0 : i32
    return %arg0, %c0_i32 : i32, i32
  }
}

</mosaic_0001>

<llo_original>
// kernel: tpu_custom_call.1
$region0: #{tpu_custom_call.1}
  #allocation0 [shape = 'u32[]', space=smem, size = 0x4, offset = 0x4, fixed_abs, tag = 'smem constant byte address 0x4 - core index']
  #allocation1 [shape = 'u32[144,128]{1,0:T(1,128)}', space=vmem, size = 0x12000, scoped, tag = 'internal scratch']
  #allocation2 [shape = 's32[1]{0}', space=sflag, size = 0x4, scoped, tag = 'scoped memory for tpu_custom_call.1']
  #allocation3 [shape = 's32[1]{0:T(128)S(6)}', space=smem, size = 0x200, scoped, tag = 'prefetched SMEM operand 0']
  %s0 = inlined_call_operand.<no memory space> [shape: s32[1], index: 0, kind: input, shape index: {}]
  %s1 = inlined_call_operand.hbm [shape: f32[128,128], index: 1, kind: input, shape index: {}]
  %s2 = inlined_call_operand.hbm [shape: f32[128,128], index: 2, kind: input, shape index: {}]
  %s3 = inlined_call_operand.hbm [shape: f32[128,128], index: 3, kind: input, shape index: {}]
  %s4 = inlined_call_operand.hbm [shape: f32[128,256], index: 4, kind: output, shape index: {}]
  %s5 = sld [smem:[#allocation0]]
  $region34: #{tpu_custom_call.1} parent=0
    _
  %s7 = ssub.s32 1, %s5
  %s8 = scalar_select 0, %s7, %s5
  %9 = sst [smem:[#allocation3]] %s0
  $region1: #{tpu_custom_call.1} parent=0
    #allocation4 [shape = 'u8[65536]{0}', space=vmem, size = 0x10000, scoped, tag = 'input window, operand 1, single buffered']
    #allocation5 [shape = 's32[1]{0}', space=sflag, size = 0x4, scoped, tag = 'scoped memory for tpu_custom_call.1']
    #allocation6 [shape = 's32[1]{0}', space=sflag, size = 0x4, scoped, tag = 'scoped memory for tpu_custom_call.1']
    #allocation7 [shape = 'u8[65536]{0}', space=vmem, size = 0x10000, scoped, tag = 'input window, operand 2, single buffered']
    #allocation8 [shape = 's32[1]{0}', space=sflag, size = 0x4, scoped, tag = 'scoped memory for tpu_custom_call.1']
    #allocation9 [shape = 'u8[65536]{0}', space=vmem, size = 0x10000, scoped, tag = 'input window, operand 3, single buffered']
    #allocation10 [shape = 'u8[131072]{0}', space=vmem, size = 0x20000, scoped, tag = 'output window, operand 0, single buffered']
    %10 = vsyncpa [#allocation5], 0
    %11 = vsyncpa [#allocation8], 0
    %12 = vsyncpa [#allocation6], 0
    // Predicated region
    $region2: #{tpu_custom_call.1} parent=1 // pred_check
      _
    $region3: #{tpu_custom_call.1} parent=1 // pred_check_branch
      %14 = sbr.rel (0) target = $region5
    $region4: #{tpu_custom_call.1} parent=1 // pred_region
      %s16 = ssub.s32 2048, 2048
      %17 = vsyncadd [#allocation5], %s16
      %s18 = sshll.u32 [#allocation4], 4
      %s19 = int_to_ptr.vmem [resolvable:$true] %s18
      %24 = dma.hbm_to_vmem [thread:$0]  %s1, 2048, %s19, [#allocation5], 128, 128, 8
    $region5: #{tpu_custom_call.1} parent=1 // pred_fallthru
      _
    // Predicated region
    $region6: #{tpu_custom_call.1} parent=1 // pred_check
      _
    $region7: #{tpu_custom_call.1} parent=1 // pred_check_branch
      %26 = sbr.rel (0) target = $region9
    $region8: #{tpu_custom_call.1} parent=1 // pred_region
      %s28 = ssub.s32 2048, 2048
      %29 = vsyncadd [#allocation8], %s28
      %s30 = sshll.u32 [#allocation7], 4
      %s31 = int_to_ptr.vmem [resolvable:$true] %s30
      %36 = dma.hbm_to_vmem [thread:$0]  %s2, 2048, %s31, [#allocation8], 128, 128, 8
    $region9: #{tpu_custom_call.1} parent=1 // pred_fallthru
      _
    // Predicated region
    $region10: #{tpu_custom_call.1} parent=1 // pred_check
      _
    $region11: #{tpu_custom_call.1} parent=1 // pred_check_branch
      %38 = sbr.rel (0) target = $region13
    $region12: #{tpu_custom_call.1} parent=1 // pred_region
      %s40 = ssub.s32 2048, 2048
      %41 = vsyncadd [#allocation8], %s40
      %s42 = sshll.u32 [#allocation9], 4
      %s43 = int_to_ptr.vmem [resolvable:$true] %s42
      %48 = dma.hbm_to_vmem [thread:$0]  %s3, 2048, %s43, [#allocation8], 128, 128, 8
    $region13: #{tpu_custom_call.1} parent=1 // pred_fallthru
      _
    // Predicated region
    $region14: #{tpu_custom_call.1} parent=1 // pred_check
      _
    $region15: #{tpu_custom_call.1} parent=1 // pred_check_branch
      %50 = sbr.rel (0) target = $region17
    $region16: #{tpu_custom_call.1} parent=1 // pred_region
      %51 = dma.done [#allocation5], 2048
    $region17: #{tpu_custom_call.1} parent=1 // pred_fallthru
      _
    // Predicated region
    $region18: #{tpu_custom_call.1} parent=1 // pred_check
      _
    $region19: #{tpu_custom_call.1} parent=1 // pred_check_branch
      %53 = sbr.rel (0) target = $region21
    $region20: #{tpu_custom_call.1} parent=1 // pred_region
      %54 = dma.done [#allocation8], 2048
    $region21: #{tpu_custom_call.1} parent=1 // pred_fallthru
      _
    // Predicated region
    $region22: #{tpu_custom_call.1} parent=1 // pred_check
      _
    $region23: #{tpu_custom_call.1} parent=1 // pred_check_branch
      %56 = sbr.rel (0) target = $region25
    $region24: #{tpu_custom_call.1} parent=1 // pred_region
      %57 = dma.done [#allocation8], 2048
    $region25: #{tpu_custom_call.1} parent=1 // pred_fallthru
      _
    %s58 = smul.u32 0, 128
    %s59 = scalar_lea.vmem [#allocation4], %s58
    %v60 = vld [vmem:[%s59] sm:$0xff]
    %v61 = vld [vmem:[%s59 + $0x8] sm:$0xff]
    %v62 = vld [vmem:[%s59 + $0x10] sm:$0xff]
    %v63 = vld [vmem:[%s59 + $0x18] sm:$0xff]
    %v64 = vld [vmem:[%s59 + $0x20] sm:$0xff]
    %v65 = vld [vmem:[%s59 + $0x28] sm:$0xff]
    %v66 = vld [vmem:[%s59 + $0x30] sm:$0xff]
    %v67 = vld [vmem:[%s59 + $0x38] sm:$0xff]
    %v68 = vld [vmem:[%s59 + $0x40] sm:$0xff]
    %v69 = vld [vmem:[%s59 + $0x48] sm:$0xff]
    %v70 = vld [vmem:[%s59 + $0x50] sm:$0xff]
    %v71 = vld [vmem:[%s59 + $0x58] sm:$0xff]
    %v72 = vld [vmem:[%s59 + $0x60] sm:$0xff]
    %v73 = vld [vmem:[%s59 + $0x68] sm:$0xff]
    %v74 = vld [vmem:[%s59 + $0x70] sm:$0xff]
    %v75 = vld [vmem:[%s59 + $0x78] sm:$0xff]
    %v76 = vld [vmem:[#allocation4] sm:$0xff]
    %v77 = vld [vmem:[#allocation4 + $0x8] sm:$0xff]
    %v78 = vld [vmem:[#allocation4 + $0x10] sm:$0xff]
    %v79 = vld [vmem:[#allocation4 + $0x18] sm:$0xff]
    %v80 = vld [vmem:[#allocation4 + $0x20] sm:$0xff]
    %v81 = vld [vmem:[#allocation4 + $0x28] sm:$0xff]
    %v82 = vld [vmem:[#allocation4 + $0x30] sm:$0xff]
    %v83 = vld [vmem:[#allocation4 + $0x38] sm:$0xff]
    %v84 = vld [vmem:[#allocation4 + $0x40] sm:$0xff]
    %v85 = vld [vmem:[#allocation4 + $0x48] sm:$0xff]
    %v86 = vld [vmem:[#allocation4 + $0x50] sm:$0xff]
    %v87 = vld [vmem:[#allocation4 + $0x58] sm:$0xff]
    %v88 = vld [vmem:[#allocation4 + $0x60] sm:$0xff]
    %v89 = vld [vmem:[#allocation4 + $0x68] sm:$0xff]
    %v90 = vld [vmem:[#allocation4 + $0x70] sm:$0xff]
    %v91 = vld [vmem:[#allocation4 + $0x78] sm:$0xff]
    %v92 = vld [vmem:[#allocation7] sm:$0xff]
    %v93 = vld [vmem:[#allocation7 + $0x8] sm:$0xff]
    %v94 = vld [vmem:[#allocation7 + $0x10] sm:$0xff]
    %v95 = vld [vmem:[#allocation7 + $0x18] sm:$0xff]
    %v96 = vld [vmem:[#allocation7 + $0x20] sm:$0xff]
    %v97 = vld [vmem:[#allocation7 + $0x28] sm:$0xff]
    %v98 = vld [vmem:[#allocation7 + $0x30] sm:$0xff]
    %v99 = vld [vmem:[#allocation7 + $0x38] sm:$0xff]
    %v100 = vld [vmem:[#allocation7 + $0x40] sm:$0xff]
    %v101 = vld [vmem:[#allocation7 + $0x48] sm:$0xff]
    %v102 = vld [vmem:[#allocation7 + $0x50] sm:$0xff]
    %v103 = vld [vmem:[#allocation7 + $0x58] sm:$0xff]
    %v104 = vld [vmem:[#allocation7 + $0x60] sm:$0xff]
    %v105 = vld [vmem:[#allocation7 + $0x68] sm:$0xff]
    %v106 = vld [vmem:[#allocation7 + $0x70] sm:$0xff]
    %v107 = vld [vmem:[#allocation7 + $0x78] sm:$0xff]
    %v108 = vld [vmem:[#allocation9] sm:$0xff]
    %v109 = vld [vmem:[#allocation9 + $0x8] sm:$0xff]
    %v110 = vld [vmem:[#allocation9 + $0x10] sm:$0xff]
    %v111 = vld [vmem:[#allocation9 + $0x18] sm:$0xff]
    %v112 = vld [vmem:[#allocation9 + $0x20] sm:$0xff]
    %v113 = vld [vmem:[#allocation9 + $0x28] sm:$0xff]
    %v114 = vld [vmem:[#allocation9 + $0x30] sm:$0xff]
    %v115 = vld [vmem:[#allocation9 + $0x38] sm:$0xff]
    %v116 = vld [vmem:[#allocation9 + $0x40] sm:$0xff]
    %v117 = vld [vmem:[#allocation9 + $0x48] sm:$0xff]
    %v118 = vld [vmem:[#allocation9 + $0x50] sm:$0xff]
    %v119 = vld [vmem:[#allocation9 + $0x58] sm:$0xff]
    %v120 = vld [vmem:[#allocation9 + $0x60] sm:$0xff]
    %v121 = vld [vmem:[#allocation9 + $0x68] sm:$0xff]
    %v122 = vld [vmem:[#allocation9 + $0x70] sm:$0xff]
    %v123 = vld [vmem:[#allocation9 + $0x78] sm:$0xff]
    %124 = vmatprep.subr.mxu0 0.0
    %125 = vmatpush1.msra.mxu0 %v91
    %126 = vmatprep.subr.mxu0 0.0
    %127 = vmatpush1.msra.mxu0 %v90
    %128 = vmatprep.subr.mxu0 0.0
    %129 = vmatpush1.msra.mxu0 %v89
    %130 = vmatprep.subr.mxu0 0.0
    %131 = vmatpush1.msra.mxu0 %v88
    %132 = vmatprep.subr.mxu0 0.0
    %133 = vmatpush1.msra.mxu0 %v87
    %134 = vmatprep.subr.mxu0 0.0
    %135 = vmatpush1.msra.mxu0 %v86
    %136 = vmatprep.subr.mxu0 0.0
    %137 = vmatpush1.msra.mxu0 %v85
    %138 = vmatprep.subr.mxu0 0.0
    %139 = vmatpush1.msra.mxu0 %v84
    %140 = vmatprep.subr.mxu0 0.0
    %141 = vmatpush1.msra.mxu0 %v83
    %142 = vmatprep.subr.mxu0 0.0
    %143 = vmatpush1.msra.mxu0 %v82
    %144 = vmatprep.subr.mxu0 0.0
    %145 = vmatpush1.msra.mxu0 %v81
    %146 = vmatprep.subr.mxu0 0.0
    %147 = vmatpush1.msra.mxu0 %v80
    %148 = vmatprep.subr.mxu0 0.0
    %149 = vmatpush1.msra.mxu0 %v79
    %150 = vmatprep.subr.mxu0 0.0
    %151 = vmatpush1.msra.mxu0 %v78
    %152 = vmatprep.subr.mxu0 0.0
    %153 = vmatpush1.msra.mxu0 %v77
    %154 = vmatprep.subr.mxu0 0.0
    %155 = vmatpush1.msra.mxu0 %v76
    %156 = vmatprep.subr.mxu0 0.0
    %157 = vmatpush2.msra.mxu0 0.0
    %158 = vmatprep.subr.mxu0 0.0
    %159 = vmatpush2.msra.mxu0 0.0
    %160 = vmatprep.subr.mxu0 0.0
    %161 = vmatpush2.msra.mxu0 0.0
    %162 = vmatprep.subr.mxu0 0.0
    %163 = vmatpush2.msra.mxu0 0.0
    %164 = vmatprep.subr.mxu0 0.0
    %165 = vmatpush2.msra.mxu0 0.0
    %166 = vmatprep.subr.mxu0 0.0
    %167 = vmatpush2.msra.mxu0 0.0
    %168 = vmatprep.subr.mxu0 0.0
    %169 = vmatpush2.msra.mxu0 0.0
    %170 = vmatprep.subr.mxu0 0.0
    %171 = vmatpush2.msra.mxu0 0.0
    %172 = vmatprep.subr.mxu0 0.0
    %173 = vmatpush2.msra.mxu0 0.0
    %174 = vmatprep.subr.mxu0 0.0
    %175 = vmatpush2.msra.mxu0 0.0
    %176 = vmatprep.subr.mxu0 0.0
    %177 = vmatpush2.msra.mxu0 0.0
    %178 = vmatprep.subr.mxu0 0.0
    %179 = vmatpush2.msra.mxu0 0.0
    %180 = vmatprep.subr.mxu0 0.0
    %181 = vmatpush2.msra.mxu0 0.0
    %182 = vmatprep.subr.mxu0 0.0
    %183 = vmatpush2.msra.mxu0 0.0
    %184 = vmatprep.subr.mxu0 0.0
    %185 = vmatpush2.msra.mxu0 0.0
    %186 = vmatprep.subr.mxu0 0.0
    %187 = vmatpush2.msra.mxu0 0.0
    %188 = vmatprep.mubr.f32.mxu0 0.0
    %189 = vmatmul.mubr.f32.gmra.mxu0 %v60
    %v190 = vpop.f32.mrf.mxu0
    %v191 = vadd.f32 0.0, %v190
    %v192 = vpop.f32.mrf.mxu0
    %193 = vmatprep.mubr.f32.mxu0 0.0
    %194 = vmatmul.mubr.f32.gmra.mxu0 %v61
    %v195 = vpop.f32.mrf.mxu0
    %v196 = vadd.f32 0.0, %v195
    %v197 = vpop.f32.mrf.mxu0
    %198 = vmatprep.mubr.f32.mxu0 0.0
    %199 = vmatmul.mubr.f32.gmra.mxu0 %v62
    %v200 = vpop.f32.mrf.mxu0
    %v201 = vadd.f32 0.0, %v200
    %v202 = vpop.f32.mrf.mxu0
    %203 = vmatprep.mubr.f32.mxu0 0.0
    %204 = vmatmul.mubr.f32.gmra.mxu0 %v63
    %v205 = vpop.f32.mrf.mxu0
    %v206 = vadd.f32 0.0, %v205
    %v207 = vpop.f32.mrf.mxu0
    %208 = vmatprep.mubr.f32.mxu0 0.0
    %209 = vmatmul.mubr.f32.gmra.mxu0 %v64
    %v210 = vpop.f32.mrf.mxu0
    %v211 = vadd.f32 0.0, %v210
    %v212 = vpop.f32.mrf.mxu0
    %213 = vmatprep.mubr.f32.mxu0 0.0
    %214 = vmatmul.mubr.f32.gmra.mxu0 %v65
    %v215 = vpop.f32.mrf.mxu0
    %v216 = vadd.f32 0.0, %v215
    %v217 = vpop.f32.mrf.mxu0
    %218 = vmatprep.mubr.f32.mxu0 0.0
    %219 = vmatmul.mubr.f32.gmra.mxu0 %v66
    %v220 = vpop.f32.mrf.mxu0
    %v221 = vadd.f32 0.0, %v220
    %v222 = vpop.f32.mrf.mxu0
    %223 = vmatprep.mubr.f32.mxu0 0.0
    %224 = vmatmul.mubr.f32.gmra.mxu0 %v67
    %v225 = vpop.f32.mrf.mxu0
    %v226 = vadd.f32 0.0, %v225
    %v227 = vpop.f32.mrf.mxu0
    %228 = vmatprep.mubr.f32.mxu0 0.0
    %229 = vmatmul.mubr.f32.gmra.mxu0 %v68
    %v230 = vpop.f32.mrf.mxu0
    %v231 = vadd.f32 0.0, %v230
    %v232 = vpop.f32.mrf.mxu0
    %233 = vmatprep.mubr.f32.mxu0 0.0
    %234 = vmatmul.mubr.f32.gmra.mxu0 %v69
    %v235 = vpop.f32.mrf.mxu0
    %v236 = vadd.f32 0.0, %v235
    %v237 = vpop.f32.mrf.mxu0
    %238 = vmatprep.mubr.f32.mxu0 0.0
    %239 = vmatmul.mubr.f32.gmra.mxu0 %v70
    %v240 = vpop.f32.mrf.mxu0
    %v241 = vadd.f32 0.0, %v240
    %v242 = vpop.f32.mrf.mxu0
    %243 = vmatprep.mubr.f32.mxu0 0.0
    %244 = vmatmul.mubr.f32.gmra.mxu0 %v71
    %v245 = vpop.f32.mrf.mxu0
    %v246 = vadd.f32 0.0, %v245
    %v247 = vpop.f32.mrf.mxu0
    %248 = vmatprep.mubr.f32.mxu0 0.0
    %249 = vmatmul.mubr.f32.gmra.mxu0 %v72
    %v250 = vpop.f32.mrf.mxu0
    %v251 = vadd.f32 0.0, %v250
    %v252 = vpop.f32.mrf.mxu0
    %253 = vmatprep.mubr.f32.mxu0 0.0
    %254 = vmatmul.mubr.f32.gmra.mxu0 %v73
    %v255 = vpop.f32.mrf.mxu0
    %v256 = vadd.f32 0.0, %v255
    %v257 = vpop.f32.mrf.mxu0
    %258 = vmatprep.mubr.f32.mxu0 0.0
    %259 = vmatmul.mubr.f32.gmra.mxu0 %v74
    %v260 = vpop.f32.mrf.mxu0
    %v261 = vadd.f32 0.0, %v260
    %v262 = vpop.f32.mrf.mxu0
    %263 = vmatprep.mubr.f32.mxu0 0.0
    %264 = vmatmul.mubr.f32.gmra.mxu0 %v75
    %v265 = vpop.f32.mrf.mxu0
    %v266 = vadd.f32 0.0, %v265
    %v267 = vpop.f32.mrf.mxu0
    %268 = vdwg.mxu0
    %269 = vmatprep.subr.mxu0 0.0
    %270 = vmatpush1.msra.mxu0 %v123
    %271 = vmatprep.subr.mxu0 0.0
    %272 = vmatpush1.msra.mxu0 %v122
    %273 = vmatprep.subr.mxu0 0.0
    %274 = vmatpush1.msra.mxu0 %v121
    %275 = vmatprep.subr.mxu0 0.0
    %276 = vmatpush1.msra.mxu0 %v120
    %277 = vmatprep.subr.mxu0 0.0
    %278 = vmatpush1.msra.mxu0 %v119
    %279 = vmatprep.subr.mxu0 0.0
    %280 = vmatpush1.msra.mxu0 %v118
    %281 = vmatprep.subr.mxu0 0.0
    %282 = vmatpush1.msra.mxu0 %v117
    %283 = vmatprep.subr.mxu0 0.0
    %284 = vmatpush1.msra.mxu0 %v116
    %285 = vmatprep.subr.mxu0 0.0
    %286 = vmatpush1.msra.mxu0 %v115
    %287 = vmatprep.subr.mxu0 0.0
    %288 = vmatpush1.msra.mxu0 %v114
    %289 = vmatprep.subr.mxu0 0.0
    %290 = vmatpush1.msra.mxu0 %v113
    %291 = vmatprep.subr.mxu0 0.0
    %292 = vmatpush1.msra.mxu0 %v112
    %293 = vmatprep.subr.mxu0 0.0
    %294 = vmatpush1.msra.mxu0 %v111
    %295 = vmatprep.subr.mxu0 0.0
    %296 = vmatpush1.msra.mxu0 %v110
    %297 = vmatprep.subr.mxu0 0.0
    %298 = vmatpush1.msra.mxu0 %v109
    %299 = vmatprep.subr.mxu0 0.0
    %300 = vmatpush1.msra.mxu0 %v108
    %301 = vmatprep.subr.mxu0 0.0
    %302 = vmatpush2.msra.mxu0 0.0
    %303 = vmatprep.subr.mxu0 0.0
    %304 = vmatpush2.msra.mxu0 0.0
    %305 = vmatprep.subr.mxu0 0.0
    %306 = vmatpush2.msra.mxu0 0.0
    %307 = vmatprep.subr.mxu0 0.0
    %308 = vmatpush2.msra.mxu0 0.0
    %309 = vmatprep.subr.mxu0 0.0
    %310 = vmatpush2.msra.mxu0 0.0
    %311 = vmatprep.subr.mxu0 0.0
    %312 = vmatpush2.msra.mxu0 0.0
    %313 = vmatprep.subr.mxu0 0.0
    %314 = vmatpush2.msra.mxu0 0.0
    %315 = vmatprep.subr.mxu0 0.0
    %316 = vmatpush2.msra.mxu0 0.0
    %317 = vmatprep.subr.mxu0 0.0
    %318 = vmatpush2.msra.mxu0 0.0
    %319 = vmatprep.subr.mxu0 0.0
    %320 = vmatpush2.msra.mxu0 0.0
    %321 = vmatprep.subr.mxu0 0.0
    %322 = vmatpush2.msra.mxu0 0.0
    %323 = vmatprep.subr.mxu0 0.0
    %324 = vmatpush2.msra.mxu0 0.0
    %325 = vmatprep.subr.mxu0 0.0
    %326 = vmatpush2.msra.mxu0 0.0
    %327 = vmatprep.subr.mxu0 0.0
    %328 = vmatpush2.msra.mxu0 0.0
    %329 = vmatprep.subr.mxu0 0.0
    %330 = vmatpush2.msra.mxu0 0.0
    %331 = vmatprep.subr.mxu0 0.0
    %332 = vmatpush2.msra.mxu0 0.0
    %333 = vmatprep.mubr.f32.mxu0 0.0
    %334 = vmatmul.mubr.f32.gmra.mxu0 %v92
    %v335 = vpop.f32.mrf.mxu0
    %v336 = vadd.f32 0.0, %v335
    %v337 = vpop.f32.mrf.mxu0
    %338 = vmatprep.mubr.f32.mxu0 0.0
    %339 = vmatmul.mubr.f32.gmra.mxu0 %v93
    %v340 = vpop.f32.mrf.mxu0
    %v341 = vadd.f32 0.0, %v340
    %v342 = vpop.f32.mrf.mxu0
    %343 = vmatprep.mubr.f32.mxu0 0.0
    %344 = vmatmul.mubr.f32.gmra.mxu0 %v94
    %v345 = vpop.f32.mrf.mxu0
    %v346 = vadd.f32 0.0, %v345
    %v347 = vpop.f32.mrf.mxu0
    %348 = vmatprep.mubr.f32.mxu0 0.0
    %349 = vmatmul.mubr.f32.gmra.mxu0 %v95
    %v350 = vpop.f32.mrf.mxu0
    %v351 = vadd.f32 0.0, %v350
    %v352 = vpop.f32.mrf.mxu0
    %353 = vmatprep.mubr.f32.mxu0 0.0
    %354 = vmatmul.mubr.f32.gmra.mxu0 %v96
    %v355 = vpop.f32.mrf.mxu0
    %v356 = vadd.f32 0.0, %v355
    %v357 = vpop.f32.mrf.mxu0
    %358 = vmatprep.mubr.f32.mxu0 0.0
    %359 = vmatmul.mubr.f32.gmra.mxu0 %v97
    %v360 = vpop.f32.mrf.mxu0
    %v361 = vadd.f32 0.0, %v360
    %v362 = vpop.f32.mrf.mxu0
    %363 = vmatprep.mubr.f32.mxu0 0.0
    %364 = vmatmul.mubr.f32.gmra.mxu0 %v98
    %v365 = vpop.f32.mrf.mxu0
    %v366 = vadd.f32 0.0, %v365
    %v367 = vpop.f32.mrf.mxu0
    %368 = vmatprep.mubr.f32.mxu0 0.0
    %369 = vmatmul.mubr.f32.gmra.mxu0 %v99
    %v370 = vpop.f32.mrf.mxu0
    %v371 = vadd.f32 0.0, %v370
    %v372 = vpop.f32.mrf.mxu0
    %373 = vmatprep.mubr.f32.mxu0 0.0
    %374 = vmatmul.mubr.f32.gmra.mxu0 %v100
    %v375 = vpop.f32.mrf.mxu0
    %v376 = vadd.f32 0.0, %v375
    %v377 = vpop.f32.mrf.mxu0
    %378 = vmatprep.mubr.f32.mxu0 0.0
    %379 = vmatmul.mubr.f32.gmra.mxu0 %v101
    %v380 = vpop.f32.mrf.mxu0
    %v381 = vadd.f32 0.0, %v380
    %v382 = vpop.f32.mrf.mxu0
    %383 = vmatprep.mubr.f32.mxu0 0.0
    %384 = vmatmul.mubr.f32.gmra.mxu0 %v102
    %v385 = vpop.f32.mrf.mxu0
    %v386 = vadd.f32 0.0, %v385
    %v387 = vpop.f32.mrf.mxu0
    %388 = vmatprep.mubr.f32.mxu0 0.0
    %389 = vmatmul.mubr.f32.gmra.mxu0 %v103
    %v390 = vpop.f32.mrf.mxu0
    %v391 = vadd.f32 0.0, %v390
    %v392 = vpop.f32.mrf.mxu0
    %393 = vmatprep.mubr.f32.mxu0 0.0
    %394 = vmatmul.mubr.f32.gmra.mxu0 %v104
    %v395 = vpop.f32.mrf.mxu0
    %v396 = vadd.f32 0.0, %v395
    %v397 = vpop.f32.mrf.mxu0
    %398 = vmatprep.mubr.f32.mxu0 0.0
    %399 = vmatmul.mubr.f32.gmra.mxu0 %v105
    %v400 = vpop.f32.mrf.mxu0
    %v401 = vadd.f32 0.0, %v400
    %v402 = vpop.f32.mrf.mxu0
    %403 = vmatprep.mubr.f32.mxu0 0.0
    %404 = vmatmul.mubr.f32.gmra.mxu0 %v106
    %v405 = vpop.f32.mrf.mxu0
    %v406 = vadd.f32 0.0, %v405
    %v407 = vpop.f32.mrf.mxu0
    %408 = vmatprep.mubr.f32.mxu0 0.0
    %409 = vmatmul.mubr.f32.gmra.mxu0 %v107
    %v410 = vpop.f32.mrf.mxu0
    %v411 = vadd.f32 0.0, %v410
    %v412 = vpop.f32.mrf.mxu0
    %413 = vdwg.mxu0
    %v414 = vadd.f32 %v92, %v336
    %v415 = vadd.f32 %v93, %v341
    %v416 = vadd.f32 %v94, %v346
    %v417 = vadd.f32 %v95, %v351
    %v418 = vadd.f32 %v96, %v356
    %v419 = vadd.f32 %v97, %v361
    %v420 = vadd.f32 %v98, %v366
    %v421 = vadd.f32 %v99, %v371
    %v422 = vadd.f32 %v100, %v376
    %v423 = vadd.f32 %v101, %v381
    %v424 = vadd.f32 %v102, %v386
    %v425 = vadd.f32 %v103, %v391
    %v426 = vadd.f32 %v104, %v396
    %v427 = vadd.f32 %v105, %v401
    %v428 = vadd.f32 %v106, %v406
    %v429 = vadd.f32 %v107, %v411
    %s430 = sld [smem:[#allocation3]]
    %s431 = scvt.s32.f32 %s430
    %v432 = vstv %s431
    %v433 = vmul.f32 %v60, %v432
    %v434 = vmul.f32 %v61, %v432
    %v435 = vmul.f32 %v62, %v432
    %v436 = vmul.f32 %v63, %v432
    %v437 = vmul.f32 %v64, %v432
    %v438 = vmul.f32 %v65, %v432
    %v439 = vmul.f32 %v66, %v432
    %v440 = vmul.f32 %v67, %v432
    %v441 = vmul.f32 %v68, %v432
    %v442 = vmul.f32 %v69, %v432
    %v443 = vmul.f32 %v70, %v432
    %v444 = vmul.f32 %v71, %v432
    %v445 = vmul.f32 %v72, %v432
    %v446 = vmul.f32 %v73, %v432
    %v447 = vmul.f32 %v74, %v432
    %v448 = vmul.f32 %v75, %v432
    %v449 = vadd.f32 %v191, %v433
    %v450 = vadd.f32 %v196, %v434
    %v451 = vadd.f32 %v201, %v435
    %v452 = vadd.f32 %v206, %v436
    %v453 = vadd.f32 %v211, %v437
    %v454 = vadd.f32 %v216, %v438
    %v455 = vadd.f32 %v221, %v439
    %v456 = vadd.f32 %v226, %v440
    %v457 = vadd.f32 %v231, %v441
    %v458 = vadd.f32 %v236, %v442
    %v459 = vadd.f32 %v241, %v443
    %v460 = vadd.f32 %v246, %v444
    %v461 = vadd.f32 %v251, %v445
    %v462 = vadd.f32 %v256, %v446
    %v463 = vadd.f32 %v261, %v447
    %v464 = vadd.f32 %v266, %v448
    %v465 = vmin.f32 %v191, 20.0
    %v466 = vmin.f32 %v196, 20.0
    %v467 = vmin.f32 %v201, 20.0
    %v468 = vmin.f32 %v206, 20.0
    %v469 = vmin.f32 %v211, 20.0
    %v470 = vmin.f32 %v216, 20.0
    %v471 = vmin.f32 %v221, 20.0
    %v472 = vmin.f32 %v226, 20.0
    %v473 = vmin.f32 %v231, 20.0
    %v474 = vmin.f32 %v236, 20.0
    %v475 = vmin.f32 %v241, 20.0
    %v476 = vmin.f32 %v246, 20.0
    %v477 = vmin.f32 %v251, 20.0
    %v478 = vmin.f32 %v256, 20.0
    %v479 = vmin.f32 %v261, 20.0
    %v480 = vmin.f32 %v266, 20.0
    %v481 = vadd.f32 %v449, %v465
    %v482 = vadd.f32 %v450, %v466
    %v483 = vadd.f32 %v451, %v467
    %v484 = vadd.f32 %v452, %v468
    %v485 = vadd.f32 %v453, %v469
    %v486 = vadd.f32 %v454, %v470
    %v487 = vadd.f32 %v455, %v471
    %v488 = vadd.f32 %v456, %v472
    %v489 = vadd.f32 %v457, %v473
    %v490 = vadd.f32 %v458, %v474
    %v491 = vadd.f32 %v459, %v475
    %v492 = vadd.f32 %v460, %v476
    %v493 = vadd.f32 %v461, %v477
    %v494 = vadd.f32 %v462, %v478
    %v495 = vadd.f32 %v463, %v479
    %v496 = vadd.f32 %v464, %v480
    %497 = vst [vmem:[#allocation10] sm:$0xff] %v481
    %498 = vst [vmem:[#allocation10 + $0x10] sm:$0xff] %v482
    %499 = vst [vmem:[#allocation10 + $0x20] sm:$0xff] %v483
    %500 = vst [vmem:[#allocation10 + $0x30] sm:$0xff] %v484
    %501 = vst [vmem:[#allocation10 + $0x40] sm:$0xff] %v485
    %502 = vst [vmem:[#allocation10 + $0x50] sm:$0xff] %v486
    %503 = vst [vmem:[#allocation10 + $0x60] sm:$0xff] %v487
    %504 = vst [vmem:[#allocation10 + $0x70] sm:$0xff] %v488
    %505 = vst [vmem:[#allocation10 + $0x80] sm:$0xff] %v489
    %506 = vst [vmem:[#allocation10 + $0x90] sm:$0xff] %v490
    %507 = vst [vmem:[#allocation10 + $0xa0] sm:$0xff] %v491
    %508 = vst [vmem:[#allocation10 + $0xb0] sm:$0xff] %v492
    %509 = vst [vmem:[#allocation10 + $0xc0] sm:$0xff] %v493
    %510 = vst [vmem:[#allocation10 + $0xd0] sm:$0xff] %v494
    %511 = vst [vmem:[#allocation10 + $0xe0] sm:$0xff] %v495
    %512 = vst [vmem:[#allocation10 + $0xf0] sm:$0xff] %v496
    %513 = vst [vmem:[#allocation10 + $0x8] sm:$0xff] %v414
    %514 = vst [vmem:[#allocation10 + $0x18] sm:$0xff] %v415
    %515 = vst [vmem:[#allocation10 + $0x28] sm:$0xff] %v416
    %516 = vst [vmem:[#allocation10 + $0x38] sm:$0xff] %v417
    %517 = vst [vmem:[#allocation10 + $0x48] sm:$0xff] %v418
    %518 = vst [vmem:[#allocation10 + $0x58] sm:$0xff] %v419
    %519 = vst [vmem:[#allocation10 + $0x68] sm:$0xff] %v420
    %520 = vst [vmem:[#allocation10 + $0x78] sm:$0xff] %v421
    %521 = vst [vmem:[#allocation10 + $0x88] sm:$0xff] %v422
    %522 = vst [vmem:[#allocation10 + $0x98] sm:$0xff] %v423
    %523 = vst [vmem:[#allocation10 + $0xa8] sm:$0xff] %v424
    %524 = vst [vmem:[#allocation10 + $0xb8] sm:$0xff] %v425
    %525 = vst [vmem:[#allocation10 + $0xc8] sm:$0xff] %v426
    %526 = vst [vmem:[#allocation10 + $0xd8] sm:$0xff] %v427
    %527 = vst [vmem:[#allocation10 + $0xe8] sm:$0xff] %v428
    %528 = vst [vmem:[#allocation10 + $0xf8] sm:$0xff] %v429
    // Predicated region
    $region26: #{tpu_custom_call.1} parent=1 // pred_check
      _
    $region27: #{tpu_custom_call.1} parent=1 // pred_check_branch
      %530 = sbr.rel (0) target = $region29
    $region28: #{tpu_custom_call.1} parent=1 // pred_region
      %s532 = ssub.s32 4096, 4096
      %533 = vsyncadd [#allocation6], %s532
      %s534 = sshll.u32 [#allocation10], 4
      %s535 = int_to_ptr.vmem [resolvable:$true] %s534
      %540 = dma.vmem_to_hbm [thread:$0]  %s535, 4096, %s4, [#allocation6], 256, 256, 16
    $region29: #{tpu_custom_call.1} parent=1 // pred_fallthru
      _
    // Predicated region
    $region30: #{tpu_custom_call.1} parent=1 // pred_check
      _
    $region31: #{tpu_custom_call.1} parent=1 // pred_check_branch
      %542 = sbr.rel (0) target = $region33
    $region32: #{tpu_custom_call.1} parent=1 // pred_region
      %543 = dma.done [#allocation6], 4096
    $region33: #{tpu_custom_call.1} parent=1 // pred_fallthru
      _
    %544 = vsyncpa [#allocation5], 1
    %545 = vsyncpa [#allocation8], 1
    %546 = vsyncpa [#allocation6], 1

</llo_original>
